<compile_context>
chip_gen: v5e
topology: v5e:2x2
jax: 0.10.0
libtpu: 0.0.40
codegen_flags: <defaults>
</compile_context>

<pallas_src>
from typing import NamedTuple

import jax
import jax.numpy as jnp
from jax.experimental import pallas as pl
from jax.experimental.pallas import tpu as pltpu


def _round_up(a, m):
    return ((a + m - 1) // m) * m


def _vmem_capacity_bytes():
    """Per-TensorCore VMEM capacity; conservative 64 MiB (v7x) on failure."""
    try:
        cap = getattr(pltpu.get_tpu_info(), "vmem_capacity_bytes", None)
        if cap:
            return int(cap)
    except Exception:
        pass
    return 64 << 20


class FoldedCouplingParams(NamedTuple):
    w1f: jax.Array      # (Dp, H) compute dtype; zero rows at I2 / pad positions
    b1: jax.Array       # (1, H)  f32
    w2: jax.Array       # (H, H)  compute dtype
    b2: jax.Array       # (1, H)  f32
    w3f: jax.Array      # (H, Dp) compute dtype; zero cols at I1 / pad positions
    b3f: jax.Array      # (1, Dp) f32; zero cols at I1 / pad positions
    num_dims: int       # D
    padded_dims: int    # Dp (multiple of 128 when lane padding applies)


def fold_coupling_params(params, num_dims, partition, *,
                         compute_dtype=jnp.bfloat16, lane_pad=128):
    """Fold even/odd select + interleave (+ lane padding) into the weights.

    Call ONCE per layer (weights are static) and pass the result to
    additive_coupling_forward.  `params` = (w1, b1, w2, b2, w3, b3) of the MLP
    Linear(d_half,H) -> ReLU -> Linear(H,H) -> ReLU -> Linear(H,d_half).
    """
    assert partition in ("even", "odd")
    D = int(num_dims)
    assert D % 2 == 0, "num_dims must be even"
    # TODO(synk): the odd-num_dims branch of the PyTorch _combine is not mapped.
    w1, b1, w2, b2, w3, b3 = params
    if partition == "even":
        idx1 = jnp.arange(0, D, 2)   # I1: MLP input / pass-through columns
        idx2 = jnp.arange(1, D, 2)   # I2: columns receiving the additive update
    else:
        idx1 = jnp.arange(1, D, 2)
        idx2 = jnp.arange(0, D, 2)
    assert w1.shape[0] == idx1.shape[0] and w3.shape[1] == idx2.shape[0]
    H1, H2 = w1.shape[1], w3.shape[0]
    Dp = _round_up(D, lane_pad) if (lane_pad and D % lane_pad) else D
    w1f = jnp.zeros((Dp, H1), jnp.float32).at[idx1, :].set(w1)
    w3f = jnp.zeros((H2, Dp), jnp.float32).at[:, idx2].set(w3)
    b3f = jnp.zeros((1, Dp), jnp.float32).at[:, idx2].set(jnp.reshape(b3, (1, -1)))
    return FoldedCouplingParams(
        w1f=w1f.astype(compute_dtype),
        b1=jnp.reshape(jnp.asarray(b1, jnp.float32), (1, -1)),
        w2=jnp.asarray(w2).astype(compute_dtype),
        b2=jnp.reshape(jnp.asarray(b2, jnp.float32), (1, -1)),
        w3f=w3f.astype(compute_dtype),
        b3f=b3f,
        num_dims=D,
        padded_dims=Dp,
    )


def _coupling_kernel(x_ref, w1_ref, b1_ref, w2_ref, b2_ref, w3_ref, b3_ref,
                     y_ref):
    """y = x + L3(relu(L2(relu(L1(x))))) with the coupling folded into weights."""
    x = x_ref[...]                                       # (tb, Dp) f32
    cd = w1_ref.dtype                                    # MXU compute dtype
    h = jnp.dot(x.astype(cd), w1_ref[...],
                preferred_element_type=jnp.float32) + b1_ref[...]
    h = jnp.maximum(h, 0.0).astype(cd)                   # cast once, post-ReLU
    h = jnp.dot(h, w2_ref[...],
                preferred_element_type=jnp.float32) + b2_ref[...]
    h = jnp.maximum(h, 0.0).astype(cd)
    m = jnp.dot(h, w3_ref[...],
                preferred_element_type=jnp.float32) + b3_ref[...]
    y_ref[...] = x + m                                   # f32 residual add


def additive_coupling_forward(x, folded, *, tb=None, single_buffer_weights=True):
    """Mirror of AdditiveCouplingLayer.forward(x) for pre-folded parameters."""
    w1f, b1, w2, b2, w3f, b3f = folded[:6]
    D, Dp = folded.num_dims, folded.padded_dims
    B = x.shape[0]
    assert x.shape == (B, D)
    H = w1f.shape[1]
    w_isz = jnp.dtype(w1f.dtype).itemsize

    x = x.astype(jnp.float32)
    if Dp != D:
        # Lane padding (features -> multiple of 128) so x loads / y stores are
        # dense.  Costs one extra XLA pass here; in production keep activations
        # padded end-to-end instead.
        x = jnp.pad(x, ((0, 0), (0, Dp - D)))

    vmem_cap = _vmem_capacity_bytes()

    def vmem_estimate(rows, single_w):
        wmul = 1 if single_w else 2
        wbytes = wmul * ((w1f.size + w2.size + w3f.size) * w_isz
                         + (b1.size + b2.size + b3f.size) * 4)
        io = 2 * 2 * rows * Dp * 4                     # double-buffered x & y tiles
        act = rows * (2 * H * (4 + w_isz) + Dp * 4)    # h1/h2 (f32 + cast) + m
        return wbytes + io + act

    # Batch tile: as large as the VMEM budget allows, capped so the "parallel"
    # grid has >= 2 steps whenever B >= 16 (v7x shards them over its 2 TCs).
    if tb is None:
        tb = 2048 if vmem_cap >= (96 << 20) else 1024   # v5e/v6e vs v7x default
    if B < 8:
        tb = B                                          # single full-array block
    else:
        cap = (B // 8) * 8
        if B >= 16:
            cap = min(cap, _round_up(pl.cdiv(B, 2), 8))
        tb = max(8, min(_round_up(int(tb), 8), cap))
        while tb > 8 and vmem_estimate(tb, single_buffer_weights) > vmem_cap // 2:
            tb = max(8, _round_up(tb // 2, 8))
    grid = (pl.cdiv(B, tb),)        # partial last block is masked by Pallas

    # TODO(synk): if the resident MLP weights alone exceed ~50% of per-TC VMEM
    # (large H on v7x's 64 MiB), switch to an H-tiled 'arbitrary' grid axis
    # instead of keeping all three weight matrices resident.

    est = vmem_estimate(tb, single_buffer_weights)
    vmem_limit = int(min(max(2 * est + (1 << 20), 4 << 20), (3 * vmem_cap) // 4))

    flops = 2 * B * (Dp * H + H * H + H * Dp) + 4 * B * (2 * H + Dp)
    bytes_accessed = int(2 * B * Dp * 4
                         + (w1f.size + w2.size + w3f.size) * w_isz
                         + (b1.size + b2.size + b3f.size) * 4)

    tile_map = lambda i: (i, 0)
    const_map = lambda i: (0, 0)

    def build(single_w):
        if single_w:
            # Constant index_map -> block never changes; one buffer is enough.
            wspec = lambda a: pl.BlockSpec(
                a.shape, const_map, pipeline_mode=pl.Buffered(buffer_count=1))
        else:
            wspec = lambda a: pl.BlockSpec(a.shape, const_map)
        return pl.pallas_call(
            _coupling_kernel,
            out_shape=jax.ShapeDtypeStruct((B, Dp), jnp.float32),
            grid=grid,
            in_specs=[
                pl.BlockSpec((tb, Dp), tile_map),        # x tile (lane-dense)
                wspec(w1f), wspec(b1), wspec(w2),        # VMEM-resident weights
                wspec(b2), wspec(w3f), wspec(b3f),
            ],
            out_specs=pl.BlockSpec((tb, Dp), tile_map),
            compiler_params=pltpu.CompilerParams(
                dimension_semantics=("parallel",),       # shard tiles across TCs
                vmem_limit_bytes=vmem_limit),
            cost_estimate=pl.CostEstimate(
                flops=flops, transcendentals=0, bytes_accessed=bytes_accessed),
        )

    args = (x, w1f, b1, w2, b2, w3f, b3f)
    if single_buffer_weights:
        try:
            out = build(True)(*args)
        except Exception:
            # This jax build rejected pipeline_mode=pl.Buffered(1); use defaults.
            out = build(False)(*args)
    else:
        out = build(False)(*args)

    return out[:, :D] if Dp != D else out


def _reference_forward(x, params, partition):
    """Pure-JAX mirror of the PyTorch module (strided split + interleave)."""
    w1, b1, w2, b2, w3, b3 = params
    B, D = x.shape
    xe, xo = x[:, 0::2], x[:, 1::2]
    x1, x2 = (xe, xo) if partition == "even" else (xo, xe)
    h = jnp.maximum(x1 @ w1 + b1, 0.0)
    h = jnp.maximum(h @ w2 + b2, 0.0)
    y2 = x2 + (h @ w3 + b3)
    if partition == "even":
        return jnp.stack([x1, y2], axis=2).reshape(B, D)
    return jnp.stack([y2, x1], axis=2).reshape(B, D)


def make_params(key, d_half, hidden):
    """MLP: Linear(d_half,H) -> ReLU -> Linear(H,H) -> ReLU -> Linear(H,d_half)."""
    k1, k2, k3, k4, k5, k6 = jax.random.split(key, 6)
    s1 = 1.0 / jnp.sqrt(d_half)
    sh = 1.0 / jnp.sqrt(hidden)
    w1 = jax.random.uniform(k1, (d_half, hidden), jnp.float32, -s1, s1)
    b1 = jax.random.uniform(k4, (1, hidden), jnp.float32, -s1, s1)
    w2 = jax.random.uniform(k2, (hidden, hidden), jnp.float32, -sh, sh)
    b2 = jax.random.uniform(k5, (1, hidden), jnp.float32, -sh, sh)
    w3 = jax.random.uniform(k3, (hidden, d_half), jnp.float32, -sh, sh)
    b3 = jax.random.uniform(k6, (1, d_half), jnp.float32, -sh, sh)
    return (w1, b1, w2, b2, w3, b3)


if __name__ == "__main__":
    key = jax.random.PRNGKey(0)
    kx, kp = jax.random.split(key)

    B, D, HIDDEN = 64, 32, 64       # num_dims=32 -> each partition has 16 features
    d_half = D // 2
    x = jax.random.normal(kx, (B, D), jnp.float32)
    params = make_params(kp, d_half, HIDDEN)

    for partition in ("even", "odd"):
        ref = _reference_forward(x, params, partition)
        start = 0 if partition == "even" else 1      # pass-through column offset

        # f32 compute path (weights folded once, reused across calls).
        # Tolerance covers MXU bf16-pass rounding of f32 matmuls on either side
        # (kernel vs XLA reference); the pass-through half must be bit-exact.
        folded_f32 = fold_coupling_params(params, D, partition,
                                          compute_dtype=jnp.float32)
        out = jax.block_until_ready(additive_coupling_forward(x, folded_f32))
        assert out.shape == (B, D)
        assert jnp.allclose(out, ref, atol=1e-2, rtol=1e-2), partition
        assert jnp.array_equal(out[:, start::2], x[:, start::2]), partition

        # Ragged batch (B % tb != 0): cdiv grid + masked partial last block.
        out_r = jax.block_until_ready(additive_coupling_forward(x[:50], folded_f32))
        assert out_r.shape == (50, D)
        assert jnp.allclose(out_r, ref[:50], atol=1e-2, rtol=1e-2), partition

        # Default bf16 MXU path (f32 accumulation + f32 residual add).
        folded_bf16 = fold_coupling_params(params, D, partition)
        out_bf16 = jax.block_until_ready(additive_coupling_forward(x, folded_bf16))
        assert jnp.allclose(out_bf16, ref, atol=1e-1, rtol=5e-2), partition
        # Pass-through half stays bit-exact even in bf16 (its update is exactly 0).
        assert jnp.array_equal(out_bf16[:, start::2], x[:, start::2]), partition

    print("KERNEL_OK")
</pallas_src>

<mosaic_0001>
module attributes {stable_mosaic.version = 11 : i64} {
  func.func @_coupling_kernel(%arg0: i32, %arg1: memref<32x128xf32, #tpu.memory_space<vmem>>, %arg2: memref<128x64xf32, #tpu.memory_space<vmem>>, %arg3: memref<1x64xf32, #tpu.memory_space<vmem>>, %arg4: memref<64x64xf32, #tpu.memory_space<vmem>>, %arg5: memref<1x64xf32, #tpu.memory_space<vmem>>, %arg6: memref<64x128xf32, #tpu.memory_space<vmem>>, %arg7: memref<1x128xf32, #tpu.memory_space<vmem>>, %arg8: memref<32x128xf32, #tpu.memory_space<vmem>>) attributes {dimension_semantics = [#tpu.dimension_semantics<parallel>], iteration_bounds = array<i64: 2>, scalar_prefetch = 0 : i64, scratch_operands = 0 : i64, tpu.core_type = #tpu.core_type<tc>, window_params = [{transform_indices = @transform_0, window_bounds = array<i64: 32, 128>}, {pipeline_mode = #tpu.pipeline_mode<synchronous>, transform_indices = @transform_1, window_bounds = array<i64: 128, 64>}, {pipeline_mode = #tpu.pipeline_mode<synchronous>, transform_indices = @transform_2, window_bounds = array<i64: 1, 64>}, {pipeline_mode = #tpu.pipeline_mode<synchronous>, transform_indices = @transform_3, window_bounds = array<i64: 64, 64>}, {pipeline_mode = #tpu.pipeline_mode<synchronous>, transform_indices = @transform_4, window_bounds = array<i64: 1, 64>}, {pipeline_mode = #tpu.pipeline_mode<synchronous>, transform_indices = @transform_5, window_bounds = array<i64: 64, 128>}, {pipeline_mode = #tpu.pipeline_mode<synchronous>, transform_indices = @transform_6, window_bounds = array<i64: 1, 128>}, {transform_indices = @transform_7, window_bounds = array<i64: 32, 128>}]} {
    %c0 = arith.constant 0 : index
    %c0_0 = arith.constant 0 : index
    %0 = vector.load %arg1[%c0, %c0_0] : memref<32x128xf32, #tpu.memory_space<vmem>>, vector<32x128xf32>
    %c0_1 = arith.constant 0 : index
    %c0_2 = arith.constant 0 : index
    %1 = vector.load %arg2[%c0_1, %c0_2] : memref<128x64xf32, #tpu.memory_space<vmem>>, vector<128x64xf32>
    %cst = arith.constant dense<0.000000e+00> : vector<32x64xf32>
    %2 = tpu.matmul %0, %1, %cst {dimension_numbers = #tpu.dot_dimension_numbers<[1], [0], [0], [1], [0, 0, 1, 1], [], []>} : vector<32x128xf32>, vector<128x64xf32>, vector<32x64xf32> -> vector<32x64xf32>
    %c0_3 = arith.constant 0 : index
    %c0_4 = arith.constant 0 : index
    %3 = vector.load %arg3[%c0_3, %c0_4] : memref<1x64xf32, #tpu.memory_space<vmem>>, vector<1x64xf32>
    %4 = vector.broadcast %3 : vector<1x64xf32> to vector<32x64xf32>
    %5 = arith.addf %2, %4 : vector<32x64xf32>
    %cst_5 = arith.constant 0.000000e+00 : f32
    %6 = vector.broadcast %cst_5 : f32 to vector<32x64xf32>
    %7 = arith.maximumf %5, %6 : vector<32x64xf32>
    %c0_6 = arith.constant 0 : index
    %c0_7 = arith.constant 0 : index
    %8 = vector.load %arg4[%c0_6, %c0_7] : memref<64x64xf32, #tpu.memory_space<vmem>>, vector<64x64xf32>
    %cst_8 = arith.constant dense<0.000000e+00> : vector<32x64xf32>
    %9 = tpu.matmul %7, %8, %cst_8 {dimension_numbers = #tpu.dot_dimension_numbers<[1], [0], [0], [1], [0, 0, 1, 1], [], []>} : vector<32x64xf32>, vector<64x64xf32>, vector<32x64xf32> -> vector<32x64xf32>
    %c0_9 = arith.constant 0 : index
    %c0_10 = arith.constant 0 : index
    %10 = vector.load %arg5[%c0_9, %c0_10] : memref<1x64xf32, #tpu.memory_space<vmem>>, vector<1x64xf32>
    %11 = vector.broadcast %10 : vector<1x64xf32> to vector<32x64xf32>
    %12 = arith.addf %9, %11 : vector<32x64xf32>
    %cst_11 = arith.constant 0.000000e+00 : f32
    %13 = vector.broadcast %cst_11 : f32 to vector<32x64xf32>
    %14 = arith.maximumf %12, %13 : vector<32x64xf32>
    %c0_12 = arith.constant 0 : index
    %c0_13 = arith.constant 0 : index
    %15 = vector.load %arg6[%c0_12, %c0_13] : memref<64x128xf32, #tpu.memory_space<vmem>>, vector<64x128xf32>
    %cst_14 = arith.constant dense<0.000000e+00> : vector<32x128xf32>
    %16 = tpu.matmul %14, %15, %cst_14 {dimension_numbers = #tpu.dot_dimension_numbers<[1], [0], [0], [1], [0, 0, 1, 1], [], []>} : vector<32x64xf32>, vector<64x128xf32>, vector<32x128xf32> -> vector<32x128xf32>
    %c0_15 = arith.constant 0 : index
    %c0_16 = arith.constant 0 : index
    %17 = vector.load %arg7[%c0_15, %c0_16] : memref<1x128xf32, #tpu.memory_space<vmem>>, vector<1x128xf32>
    %18 = vector.broadcast %17 : vector<1x128xf32> to vector<32x128xf32>
    %19 = arith.addf %16, %18 : vector<32x128xf32>
    %20 = arith.addf %0, %19 : vector<32x128xf32>
    %c0_17 = arith.constant 0 : index
    %c0_18 = arith.constant 0 : index
    %21 = vector.load %arg8[%c0_17, %c0_18] : memref<32x128xf32, #tpu.memory_space<vmem>>, vector<32x128xf32>
    tpu.vector_store %arg8[%c0_17, %c0_18], %20 {strides = array<i32>} : memref<32x128xf32, #tpu.memory_space<vmem>>, vector<32x128xf32>,
    return
  }
  func.func @transform_0(%arg0: i32) -> (i32, i32) {
    %c0_i32 = arith.constant 0 : i32
    %c0_i32_0 = arith.constant 0 : i32
    return %arg0, %c0_i32 : i32, i32
  }
  func.func @transform_1(%arg0: i32) -> (i32, i32) {
    %c0_i32 = arith.constant 0 : i32
    %c0_i32_0 = arith.constant 0 : i32
    %c0_i32_1 = arith.constant 0 : i32
    return %c0_i32, %c0_i32_0 : i32, i32
  }
  func.func @transform_2(%arg0: i32) -> (i32, i32) {
    %c0_i32 = arith.constant 0 : i32
    %c0_i32_0 = arith.constant 0 : i32
    %c0_i32_1 = arith.constant 0 : i32
    return %c0_i32, %c0_i32_0 : i32, i32
  }
  func.func @transform_3(%arg0: i32) -> (i32, i32) {
    %c0_i32 = arith.constant 0 : i32
    %c0_i32_0 = arith.constant 0 : i32
    %c0_i32_1 = arith.constant 0 : i32
    return %c0_i32, %c0_i32_0 : i32, i32
  }
  func.func @transform_4(%arg0: i32) -> (i32, i32) {
    %c0_i32 = arith.constant 0 : i32
    %c0_i32_0 = arith.constant 0 : i32
    %c0_i32_1 = arith.constant 0 : i32
    return %c0_i32, %c0_i32_0 : i32, i32
  }
  func.func @transform_5(%arg0: i32) -> (i32, i32) {
    %c0_i32 = arith.constant 0 : i32
    %c0_i32_0 = arith.constant 0 : i32
    %c0_i32_1 = arith.constant 0 : i32
    return %c0_i32, %c0_i32_0 : i32, i32
  }
  func.func @transform_6(%arg0: i32) -> (i32, i32) {
    %c0_i32 = arith.constant 0 : i32
    %c0_i32_0 = arith.constant 0 : i32
    %c0_i32_1 = arith.constant 0 : i32
    return %c0_i32, %c0_i32_0 : i32, i32
  }
  func.func @transform_7(%arg0: i32) -> (i32, i32) {
    %c0_i32 = arith.constant 0 : i32
    %c0_i32_0 = arith.constant 0 : i32
    return %arg0, %c0_i32 : i32, i32
  }
}

module attributes {stable_mosaic.version = 11 : i64} {
  func.func @_coupling_kernel(%arg0: i32, %arg1: memref<32x128xf32, #tpu.memory_space<vmem>>, %arg2: memref<128x64xf32, #tpu.memory_space<vmem>>, %arg3: memref<1x64xf32, #tpu.memory_space<vmem>>, %arg4: memref<64x64xf32, #tpu.memory_space<vmem>>, %arg5: memref<1x64xf32, #tpu.memory_space<vmem>>, %arg6: memref<64x128xf32, #tpu.memory_space<vmem>>, %arg7: memref<1x128xf32, #tpu.memory_space<vmem>>, %arg8: memref<32x128xf32, #tpu.memory_space<vmem>>) attributes {dimension_semantics = [#tpu.dimension_semantics<parallel>], iteration_bounds = array<i64: 2>, scalar_prefetch = 0 : i64, scratch_operands = 0 : i64, tpu.core_type = #tpu.core_type<tc>, window_params = [{transform_indices = @transform_0, window_bounds = array<i64: 32, 128>}, {pipeline_mode = #tpu.pipeline_mode<synchronous>, transform_indices = @transform_1, window_bounds = array<i64: 128, 64>}, {pipeline_mode = #tpu.pipeline_mode<synchronous>, transform_indices = @transform_2, window_bounds = array<i64: 1, 64>}, {pipeline_mode = #tpu.pipeline_mode<synchronous>, transform_indices = @transform_3, window_bounds = array<i64: 64, 64>}, {pipeline_mode = #tpu.pipeline_mode<synchronous>, transform_indices = @transform_4, window_bounds = array<i64: 1, 64>}, {pipeline_mode = #tpu.pipeline_mode<synchronous>, transform_indices = @transform_5, window_bounds = array<i64: 64, 128>}, {pipeline_mode = #tpu.pipeline_mode<synchronous>, transform_indices = @transform_6, window_bounds = array<i64: 1, 128>}, {transform_indices = @transform_7, window_bounds = array<i64: 32, 128>}]} {
    %c0 = arith.constant 0 : index
    %c0_0 = arith.constant 0 : index
    %0 = vector.load %arg1[%c0, %c0_0] : memref<32x128xf32, #tpu.memory_space<vmem>>, vector<32x128xf32>
    %c0_1 = arith.constant 0 : index
    %c0_2 = arith.constant 0 : index
    %1 = vector.load %arg2[%c0_1, %c0_2] : memref<128x64xf32, #tpu.memory_space<vmem>>, vector<128x64xf32>
    %cst = arith.constant dense<0.000000e+00> : vector<32x64xf32>
    %2 = tpu.matmul %0, %1, %cst {dimension_numbers = #tpu.dot_dimension_numbers<[1], [0], [0], [1], [0, 0, 1, 1], [], []>} : vector<32x128xf32>, vector<128x64xf32>, vector<32x64xf32> -> vector<32x64xf32>
    %c0_3 = arith.constant 0 : index
    %c0_4 = arith.constant 0 : index
    %3 = vector.load %arg3[%c0_3, %c0_4] : memref<1x64xf32, #tpu.memory_space<vmem>>, vector<1x64xf32>
    %4 = vector.broadcast %3 : vector<1x64xf32> to vector<32x64xf32>
    %5 = arith.addf %2, %4 : vector<32x64xf32>
    %cst_5 = arith.constant 0.000000e+00 : f32
    %6 = vector.broadcast %cst_5 : f32 to vector<32x64xf32>
    %7 = arith.maximumf %5, %6 : vector<32x64xf32>
    %c0_6 = arith.constant 0 : index
    %c0_7 = arith.constant 0 : index
    %8 = vector.load %arg4[%c0_6, %c0_7] : memref<64x64xf32, #tpu.memory_space<vmem>>, vector<64x64xf32>
    %cst_8 = arith.constant dense<0.000000e+00> : vector<32x64xf32>
    %9 = tpu.matmul %7, %8, %cst_8 {dimension_numbers = #tpu.dot_dimension_numbers<[1], [0], [0], [1], [0, 0, 1, 1], [], []>} : vector<32x64xf32>, vector<64x64xf32>, vector<32x64xf32> -> vector<32x64xf32>
    %c0_9 = arith.constant 0 : index
    %c0_10 = arith.constant 0 : index
    %10 = vector.load %arg5[%c0_9, %c0_10] : memref<1x64xf32, #tpu.memory_space<vmem>>, vector<1x64xf32>
    %11 = vector.broadcast %10 : vector<1x64xf32> to vector<32x64xf32>
    %12 = arith.addf %9, %11 : vector<32x64xf32>
    %cst_11 = arith.constant 0.000000e+00 : f32
    %13 = vector.broadcast %cst_11 : f32 to vector<32x64xf32>
    %14 = arith.maximumf %12, %13 : vector<32x64xf32>
    %c0_12 = arith.constant 0 : index
    %c0_13 = arith.constant 0 : index
    %15 = vector.load %arg6[%c0_12, %c0_13] : memref<64x128xf32, #tpu.memory_space<vmem>>, vector<64x128xf32>
    %cst_14 = arith.constant dense<0.000000e+00> : vector<32x128xf32>
    %16 = tpu.matmul %14, %15, %cst_14 {dimension_numbers = #tpu.dot_dimension_numbers<[1], [0], [0], [1], [0, 0, 1, 1], [], []>} : vector<32x64xf32>, vector<64x128xf32>, vector<32x128xf32> -> vector<32x128xf32>
    %c0_15 = arith.constant 0 : index
    %c0_16 = arith.constant 0 : index
    %17 = vector.load %arg7[%c0_15, %c0_16] : memref<1x128xf32, #tpu.memory_space<vmem>>, vector<1x128xf32>
    %18 = vector.broadcast %17 : vector<1x128xf32> to vector<32x128xf32>
    %19 = arith.addf %16, %18 : vector<32x128xf32>
    %20 = arith.addf %0, %19 : vector<32x128xf32>
    %c0_17 = arith.constant 0 : index
    %c0_18 = arith.constant 0 : index
    %21 = vector.load %arg8[%c0_17, %c0_18] : memref<32x128xf32, #tpu.memory_space<vmem>>, vector<32x128xf32>
    tpu.vector_store %arg8[%c0_17, %c0_18], %20 {strides = array<i32>} : memref<32x128xf32, #tpu.memory_space<vmem>>, vector<32x128xf32>,
    return
  }
  func.func @transform_0(%arg0: i32) -> (i32, i32) {
    %c0_i32 = arith.constant 0 : i32
    %c0_i32_0 = arith.constant 0 : i32
    return %arg0, %c0_i32 : i32, i32
  }
  func.func @transform_1(%arg0: i32) -> (i32, i32) {
    %c0_i32 = arith.constant 0 : i32
    %c0_i32_0 = arith.constant 0 : i32
    %c0_i32_1 = arith.constant 0 : i32
    return %c0_i32, %c0_i32_0 : i32, i32
  }
  func.func @transform_2(%arg0: i32) -> (i32, i32) {
    %c0_i32 = arith.constant 0 : i32
    %c0_i32_0 = arith.constant 0 : i32
    %c0_i32_1 = arith.constant 0 : i32
    return %c0_i32, %c0_i32_0 : i32, i32
  }
  func.func @transform_3(%arg0: i32) -> (i32, i32) {
    %c0_i32 = arith.constant 0 : i32
    %c0_i32_0 = arith.constant 0 : i32
    %c0_i32_1 = arith.constant 0 : i32
    return %c0_i32, %c0_i32_0 : i32, i32
  }
  func.func @transform_4(%arg0: i32) -> (i32, i32) {
    %c0_i32 = arith.constant 0 : i32
    %c0_i32_0 = arith.constant 0 : i32
    %c0_i32_1 = arith.constant 0 : i32
    return %c0_i32, %c0_i32_0 : i32, i32
  }
  func.func @transform_5(%arg0: i32) -> (i32, i32) {
    %c0_i32 = arith.constant 0 : i32
    %c0_i32_0 = arith.constant 0 : i32
    %c0_i32_1 = arith.constant 0 : i32
    return %c0_i32, %c0_i32_0 : i32, i32
  }
  func.func @transform_6(%arg0: i32) -> (i32, i32) {
    %c0_i32 = arith.constant 0 : i32
    %c0_i32_0 = arith.constant 0 : i32
    %c0_i32_1 = arith.constant 0 : i32
    return %c0_i32, %c0_i32_0 : i32, i32
  }
  func.func @transform_7(%arg0: i32) -> (i32, i32) {
    %c0_i32 = arith.constant 0 : i32
    %c0_i32_0 = arith.constant 0 : i32
    return %arg0, %c0_i32 : i32, i32
  }
}

</mosaic_0001>

<llo_original>
// kernel: tpu_custom_call.1
$region0: #{tpu_custom_call.1}
  #allocation0 [shape = 'u32[]', space=smem, size = 0x4, offset = 0x4, fixed_abs, tag = 'smem constant byte address 0x4 - core index']
  #allocation1 [shape = 'u32[72,128]{1,0:T(1,128)}', space=vmem, size = 0x9000, scoped, tag = 'internal scratch']
  %s0 = inlined_call_operand.vmem [shape: f32[64,128], index: 0, kind: input, shape index: {}]
  %s1 = inlined_call_operand.vmem [shape: f32[128,64], index: 1, kind: input, shape index: {}]
  %s2 = inlined_call_operand.hbm [shape: f32[1,64], index: 2, kind: input, shape index: {}]
  %s3 = inlined_call_operand.vmem [shape: f32[64,64], index: 3, kind: input, shape index: {}]
  %s4 = inlined_call_operand.vmem [shape: f32[1,64], index: 4, kind: input, shape index: {}]
  %s5 = inlined_call_operand.vmem [shape: f32[64,128], index: 5, kind: input, shape index: {}]
  %s6 = inlined_call_operand.vmem [shape: f32[1,128], index: 6, kind: input, shape index: {}]
  %s7 = inlined_call_operand.hbm [shape: f32[64,128], index: 7, kind: output, shape index: {}]
  %s8 = sld [smem:[#allocation0]]
  $region65: #{tpu_custom_call.1} parent=0
    _
  %s10 = ssub.s32 1, %s8
  %s11 = scalar_select 0, %s10, %s8
  $region1: #{tpu_custom_call.1} parent=0
    #allocation2 [shape = 'u8[512]{0}', space=vmem, size = 0x400, scoped, tag = 'input window, operand 2, single buffered']
    #allocation3 [shape = 's32[2]{0}', space=sflag, size = 0x8, scoped, tag = 'scoped memory for tpu_custom_call.1']
    #allocation4 [shape = 's32[2]{0}', space=sflag, size = 0x8, scoped, tag = 'scoped memory for tpu_custom_call.1']
    #allocation5 [shape = 'u8[32768]{0}', space=vmem, size = 0x8000, scoped, tag = 'output window, operand 0']
    %12 = vsyncpa [#allocation3], 0
    %13 = vsyncpa [#allocation4], 0
    %s14 = scalar_lea.sflag [#allocation4], 1
    %15 = vsyncpa %s14, 0
    loop: start=0, step=1, limit=4
    $region2: #{tpu_custom_call.1} parent=1 // loop_pre_header
      _
    $region3: #{tpu_custom_call.1} parent=1 // loop_header
      %s17 = sphi 0, %s21
      %p18 = scmp.ge.s32.totalorder %s17, 4
      %s27 = sphi 0, %s29
      %s30 = sphi 0, %s27
      %s31 = sphi 0, %s30
      %s47 = sphi 0, %s31
      %s51 = sphi 0, %s51
      %s53 = sphi 0, %s51
      %s54 = sphi 0, %s53
      %s68 = sphi 0, %s54
      %s72 = sphi 0, %s72
      %s74 = sphi 0, %s72
      %s75 = sphi 0, %s74
      %s89 = sphi 0, %s75
      %s93 = sphi 0, %s93
      %s95 = sphi 0, %s93
      %s96 = sphi 0, %s95
      %s110 = sphi 0, %s96
      %s114 = sphi 0, %s114
      %s116 = sphi 0, %s114
      %s117 = sphi 0, %s116
      %s131 = sphi 0, %s117
      %s135 = sphi 0, %s135
      %s137 = sphi 0, %s135
      %s138 = sphi 0, %s137
      %s152 = sphi 0, %s138
      %s156 = sphi 0, %s156
      %s158 = sphi 0, %s156
      %s159 = sphi 0, %s158
      %s173 = sphi 0, %s159
      %s179 = sphi 0, %s181
      %s182 = sphi 0, %s179
      %s183 = sphi 0, %s182
      %s199 = sphi 0, %s183
    $region4: #{tpu_custom_call.1} parent=1 // loop_header_branch
      %20 = sbr.rel (%p18) target = $region8
    $region5: #{tpu_custom_call.1} parent=1 // loop_body
      %s22 = ssub.s32 %s17, 1
      %s23 = ssub.s32 %s17, 2
      %s24 = sadd.s32 %s17, 1
      %s25 = ssub.s32 %s17, %s24
      %p26 = scmp.eq.s32.totalorder %s25, 0
      %s28 = sadd.s32 %s27, 1
      %s29 = scalar_select %p26, %s27, %s28
      %p32 = pneg %p26
      %p33 = scmp.eq.s32.totalorder %s17, 1
      %p34 = por %p32, %p33
      %p35 = scmp.ne.s32.totalorder %s27, %s30
      %p36 = scmp.eq.s32.totalorder %s17, 0
      %p37 = por %p35, %p36
      %p38 = scmp.ne.s32.totalorder %s27, %s30
      %p39 = scmp.eq.s32.totalorder %s22, 1
      %p40 = por %p38, %p39
      %p41 = scmp.ne.s32.totalorder %s30, %s31
      %p42 = scmp.eq.s32.totalorder %s22, 0
      %p43 = por %p41, %p42
      %p44 = scmp.ne.s32.totalorder %s30, %s31
      %p45 = scmp.eq.s32.totalorder %s23, 1
      %p46 = por %p44, %p45
      %p48 = scmp.ne.s32.totalorder %s31, %s47
      %p49 = scmp.eq.s32.totalorder %s23, 0
      %p50 = por %p48, %p49
      %s52 = sadd.s32 %s51, 1
      %p55 = scmp.eq.s32.totalorder %s17, 1
      %p56 = scmp.ne.s32.totalorder %s51, %s53
      %p57 = scmp.eq.s32.totalorder %s17, 0
      %p58 = por %p56, %p57
      %p59 = scmp.ne.s32.totalorder %s51, %s53
      %p60 = scmp.eq.s32.totalorder %s22, 1
      %p61 = por %p59, %p60
      %p62 = scmp.ne.s32.totalorder %s53, %s54
      %p63 = scmp.eq.s32.totalorder %s22, 0
      %p64 = por %p62, %p63
      %p65 = scmp.ne.s32.totalorder %s53, %s54
      %p66 = scmp.eq.s32.totalorder %s23, 1
      %p67 = por %p65, %p66
      %p69 = scmp.ne.s32.totalorder %s54, %s68
      %p70 = scmp.eq.s32.totalorder %s23, 0
      %p71 = por %p69, %p70
      %s73 = sadd.s32 %s72, 1
      %p76 = scmp.eq.s32.totalorder %s17, 1
      %p77 = scmp.ne.s32.totalorder %s72, %s74
      %p78 = scmp.eq.s32.totalorder %s17, 0
      %p79 = por %p77, %p78
      %p80 = scmp.ne.s32.totalorder %s72, %s74
      %p81 = scmp.eq.s32.totalorder %s22, 1
      %p82 = por %p80, %p81
      %p83 = scmp.ne.s32.totalorder %s74, %s75
      %p84 = scmp.eq.s32.totalorder %s22, 0
      %p85 = por %p83, %p84
      %p86 = scmp.ne.s32.totalorder %s74, %s75
      %p87 = scmp.eq.s32.totalorder %s23, 1
      %p88 = por %p86, %p87
      %p90 = scmp.ne.s32.totalorder %s75, %s89
      %p91 = scmp.eq.s32.totalorder %s23, 0
      %p92 = por %p90, %p91
      %s94 = sadd.s32 %s93, 1
      %p97 = scmp.eq.s32.totalorder %s17, 1
      %p98 = scmp.ne.s32.totalorder %s93, %s95
      %p99 = scmp.eq.s32.totalorder %s17, 0
      %p100 = por %p98, %p99
      %p101 = scmp.ne.s32.totalorder %s93, %s95
      %p102 = scmp.eq.s32.totalorder %s22, 1
      %p103 = por %p101, %p102
      %p104 = scmp.ne.s32.totalorder %s95, %s96
      %p105 = scmp.eq.s32.totalorder %s22, 0
      %p106 = por %p104, %p105
      %p107 = scmp.ne.s32.totalorder %s95, %s96
      %p108 = scmp.eq.s32.totalorder %s23, 1
      %p109 = por %p107, %p108
      %p111 = scmp.ne.s32.totalorder %s96, %s110
      %p112 = scmp.eq.s32.totalorder %s23, 0
      %p113 = por %p111, %p112
      %s115 = sadd.s32 %s114, 1
      %p118 = scmp.eq.s32.totalorder %s17, 1
      %p119 = scmp.ne.s32.totalorder %s114, %s116
      %p120 = scmp.eq.s32.totalorder %s17, 0
      %p121 = por %p119, %p120
      %p122 = scmp.ne.s32.totalorder %s114, %s116
      %p123 = scmp.eq.s32.totalorder %s22, 1
      %p124 = por %p122, %p123
      %p125 = scmp.ne.s32.totalorder %s116, %s117
      %p126 = scmp.eq.s32.totalorder %s22, 0
      %p127 = por %p125, %p126
      %p128 = scmp.ne.s32.totalorder %s116, %s117
      %p129 = scmp.eq.s32.totalorder %s23, 1
      %p130 = por %p128, %p129
      %p132 = scmp.ne.s32.totalorder %s117, %s131
      %p133 = scmp.eq.s32.totalorder %s23, 0
      %p134 = por %p132, %p133
      %s136 = sadd.s32 %s135, 1
      %p139 = scmp.eq.s32.totalorder %s17, 1
      %p140 = scmp.ne.s32.totalorder %s135, %s137
      %p141 = scmp.eq.s32.totalorder %s17, 0
      %p142 = por %p140, %p141
      %p143 = scmp.ne.s32.totalorder %s135, %s137
      %p144 = scmp.eq.s32.totalorder %s22, 1
      %p145 = por %p143, %p144
      %p146 = scmp.ne.s32.totalorder %s137, %s138
      %p147 = scmp.eq.s32.totalorder %s22, 0
      %p148 = por %p146, %p147
      %p149 = scmp.ne.s32.totalorder %s137, %s138
      %p150 = scmp.eq.s32.totalorder %s23, 1
      %p151 = por %p149, %p150
      %p153 = scmp.ne.s32.totalorder %s138, %s152
      %p154 = scmp.eq.s32.totalorder %s23, 0
      %p155 = por %p153, %p154
      %s157 = sadd.s32 %s156, 1
      %p160 = scmp.eq.s32.totalorder %s17, 1
      %p161 = scmp.ne.s32.totalorder %s156, %s158
      %p162 = scmp.eq.s32.totalorder %s17, 0
      %p163 = por %p161, %p162
      %p164 = scmp.ne.s32.totalorder %s156, %s158
      %p165 = scmp.eq.s32.totalorder %s22, 1
      %p166 = por %p164, %p165
      %p167 = scmp.ne.s32.totalorder %s158, %s159
      %p168 = scmp.eq.s32.totalorder %s22, 0
      %p169 = por %p167, %p168
      %p170 = scmp.ne.s32.totalorder %s158, %s159
      %p171 = scmp.eq.s32.totalorder %s23, 1
      %p172 = por %p170, %p171
      %p174 = scmp.ne.s32.totalorder %s159, %s173
      %p175 = scmp.eq.s32.totalorder %s23, 0
      %p176 = por %p174, %p175
      %s177 = ssub.s32 %s17, %s24
      %p178 = scmp.eq.s32.totalorder %s177, 0
      %s180 = sadd.s32 %s179, 1
      %s181 = scalar_select %p178, %s179, %s180
      %p184 = pneg %p178
      %p185 = scmp.eq.s32.totalorder %s17, 1
      %p186 = por %p184, %p185
      %p187 = scmp.ne.s32.totalorder %s179, %s182
      %p188 = scmp.eq.s32.totalorder %s17, 0
      %p189 = por %p187, %p188
      %p190 = scmp.ne.s32.totalorder %s179, %s182
      %p191 = scmp.eq.s32.totalorder %s22, 1
      %p192 = por %p190, %p191
      %p193 = scmp.ne.s32.totalorder %s182, %s183
      %p194 = scmp.eq.s32.totalorder %s22, 0
      %p195 = por %p193, %p194
      %p196 = scmp.ne.s32.totalorder %s182, %s183
      %p197 = scmp.eq.s32.totalorder %s23, 1
      %p198 = por %p196, %p197
      %p200 = scmp.ne.s32.totalorder %s183, %s199
      %p201 = scmp.eq.s32.totalorder %s23, 0
      %p202 = por %p200, %p201
      %p203 = scmp.le.s32.totalorder 1, %s17
      %p204 = scmp.lt.s32.totalorder %s17, 3
      %p205 = pnand %p203, %p204
      %p206 = pneg %p205
      // Predicated region
      $region9: #{tpu_custom_call.1} parent=5 // pred_check
        _
      $region10: #{tpu_custom_call.1} parent=5 // pred_check_branch
        %208 = sbr.rel (%p205) target = $region12
      $region11: #{tpu_custom_call.1} parent=5 // pred_region
        %s209 = ssub.s32 %s17, 1
        // Predicated region
        $region13: #{tpu_custom_call.1} parent=11 // pred_check
          %p210 = pneg %p64
        $region14: #{tpu_custom_call.1} parent=11 // pred_check_branch
          %212 = sbr.rel (%p210) target = $region16
        $region15: #{tpu_custom_call.1} parent=11 // pred_region
          _
        $region16: #{tpu_custom_call.1} parent=11 // pred_fallthru
          _
        // Predicated region
        $region17: #{tpu_custom_call.1} parent=11 // pred_check
          %p213 = pneg %p85
        $region18: #{tpu_custom_call.1} parent=11 // pred_check_branch
          %215 = sbr.rel (%p213) target = $region20
        $region19: #{tpu_custom_call.1} parent=11 // pred_region
          %217 = vsyncadd [#allocation3], 0
          %s219 = sshll.u32 %s2, 4
          %s220 = int_to_ptr.hbm [resolvable:$true] %s219
          %s221 = sshll.u32 [#allocation2], 4
          %s222 = int_to_ptr.vmem [resolvable:$true] %s221
          %224 = dma.hbm_to_vmem [thread:$0]  %s220, 16, %s222, [#allocation3]
        $region20: #{tpu_custom_call.1} parent=11 // pred_fallthru
          _
        // Predicated region
        $region21: #{tpu_custom_call.1} parent=11 // pred_check
          %p225 = pneg %p106
        $region22: #{tpu_custom_call.1} parent=11 // pred_check_branch
          %227 = sbr.rel (%p225) target = $region24
        $region23: #{tpu_custom_call.1} parent=11 // pred_region
          _
        $region24: #{tpu_custom_call.1} parent=11 // pred_fallthru
          _
        // Predicated region
        $region25: #{tpu_custom_call.1} parent=11 // pred_check
          %p228 = pneg %p127
        $region26: #{tpu_custom_call.1} parent=11 // pred_check_branch
          %230 = sbr.rel (%p228) target = $region28
        $region27: #{tpu_custom_call.1} parent=11 // pred_region
          _
        $region28: #{tpu_custom_call.1} parent=11 // pred_fallthru
          _
        // Predicated region
        $region29: #{tpu_custom_call.1} parent=11 // pred_check
          %p231 = pneg %p148
        $region30: #{tpu_custom_call.1} parent=11 // pred_check_branch
          %233 = sbr.rel (%p231) target = $region32
        $region31: #{tpu_custom_call.1} parent=11 // pred_region
          _
        $region32: #{tpu_custom_call.1} parent=11 // pred_fallthru
          _
        // Predicated region
        $region33: #{tpu_custom_call.1} parent=11 // pred_check
          %p234 = pneg %p169
        $region34: #{tpu_custom_call.1} parent=11 // pred_check_branch
          %236 = sbr.rel (%p234) target = $region36
        $region35: #{tpu_custom_call.1} parent=11 // pred_region
          _
        $region36: #{tpu_custom_call.1} parent=11 // pred_fallthru
          _
      $region12: #{tpu_custom_call.1} parent=5 // pred_fallthru
        _
      %p237 = scmp.lt.s32.totalorder %s17, 2
      // Predicated region
      $region37: #{tpu_custom_call.1} parent=5 // pred_check
        %p238 = pneg %p237
      $region38: #{tpu_custom_call.1} parent=5 // pred_check_branch
        %240 = sbr.rel (%p238) target = $region40
      $region39: #{tpu_custom_call.1} parent=5 // pred_region
        // Predicated region
        $region41: #{tpu_custom_call.1} parent=39 // pred_check
          %p241 = pneg %p37
        $region42: #{tpu_custom_call.1} parent=39 // pred_check_branch
          %243 = sbr.rel (%p241) target = $region44
        $region43: #{tpu_custom_call.1} parent=39 // pred_region
          %s244 = smul.u32 4, %s17
          %p245 = scmp.lt.s32.totalorder %s244, 7
          %s246 = scalar_select %p245, %s244, 7
          %s247 = smul.addr %s246, 8
          %s248 = scalar_lea.vmem %s0, %s247
          %s249 = smul.u32 4, %s17
        $region44: #{tpu_custom_call.1} parent=39 // pred_fallthru
          _
      $region40: #{tpu_custom_call.1} parent=5 // pred_fallthru
        _
      %p250 = scmp.le.s32.totalorder 1, %s17
      %p251 = scmp.lt.s32.totalorder %s17, 3
      %p252 = pnand %p250, %p251
      %p253 = pneg %p252
      // Predicated region
      $region45: #{tpu_custom_call.1} parent=5 // pred_check
        _
      $region46: #{tpu_custom_call.1} parent=5 // pred_check_branch
        %255 = sbr.rel (%p252) target = $region48
      $region47: #{tpu_custom_call.1} parent=5 // pred_region
        %s256 = ssub.s32 %s17, 1
        // Predicated region
        $region49: #{tpu_custom_call.1} parent=47 // pred_check
          %p257 = pneg %p85
        $region50: #{tpu_custom_call.1} parent=47 // pred_check_branch
          %259 = sbr.rel (%p257) target = $region52
        $region51: #{tpu_custom_call.1} parent=47 // pred_region
          %261 = dma.done [#allocation3], 16
        $region52: #{tpu_custom_call.1} parent=47 // pred_fallthru
          _
        %s262 = smul.u32 4, %s22
        %p263 = scmp.lt.s32.totalorder %s262, 7
        %s264 = scalar_select %p263, %s262, 7
        %s265 = smul.addr %s264, 8
        %s266 = scalar_lea.vmem %s0, %s265
        %p267 = pneg %p43
        %p268 = pneg %p40
        %p269 = pneg %p64
        %p270 = pneg %p61
        %p271 = pneg %p85
        %p272 = pneg %p82
        %p273 = pneg %p106
        %p274 = pneg %p103
        %p275 = pneg %p127
        %p276 = pneg %p124
        %p277 = pneg %p148
        %p278 = pneg %p145
        %p279 = pneg %p169
        %p280 = pneg %p166
        %p281 = pneg %p195
        %p282 = pneg %p192
        %s283 = sand.u32 %s182, 1
        %s284 = scalar_lea.sflag [#allocation4], %s283
        %s285 = sand.u32 %s182, 1
        %s286 = smul.addr %s285, 32
        %s287 = scalar_lea.vmem [#allocation5], %s286
        %s288 = smul.u32 4, %s22
        %p289 = scmp.lt.s32.totalorder %s288, 7
        %s290 = scalar_select %p289, %s288, 7
        %s291 = smul.addr %s290, 8
        %s292 = scalar_lea.vmem %s0, %s291
        %s293 = smul.u32 4, %s22
        %s294 = smul.u32 4, %s22
        %v295 = vld [vmem:[%s292] sm:$0xff]
        %v296 = vld [vmem:[%s292 + $0x8] sm:$0xff]
        %v297 = vld [vmem:[%s292 + $0x10] sm:$0xff]
        %v298 = vld [vmem:[%s292 + $0x18] sm:$0xff]
        %v299 = vld [vmem:[%s1] sm:$0xff]
        %v300 = vld [vmem:[%s1 + $0x8] sm:$0xff]
        %v301 = vld [vmem:[%s1 + $0x10] sm:$0xff]
        %v302 = vld [vmem:[%s1 + $0x18] sm:$0xff]
        %v303 = vld [vmem:[%s1 + $0x20] sm:$0xff]
        %v304 = vld [vmem:[%s1 + $0x28] sm:$0xff]
        %v305 = vld [vmem:[%s1 + $0x30] sm:$0xff]
        %v306 = vld [vmem:[%s1 + $0x38] sm:$0xff]
        %v307 = vld [vmem:[%s1 + $0x40] sm:$0xff]
        %v308 = vld [vmem:[%s1 + $0x48] sm:$0xff]
        %v309 = vld [vmem:[%s1 + $0x50] sm:$0xff]
        %v310 = vld [vmem:[%s1 + $0x58] sm:$0xff]
        %v311 = vld [vmem:[%s1 + $0x60] sm:$0xff]
        %v312 = vld [vmem:[%s1 + $0x68] sm:$0xff]
        %v313 = vld [vmem:[%s1 + $0x70] sm:$0xff]
        %v314 = vld [vmem:[%s1 + $0x78] sm:$0xff]
        %v315 = vld [vmem:[#allocation2] sm:$0x1]
        %v317 = vperm.slane %v315, 0
        %319 = vmatpush.msra.mxu0 %v314
        %320 = vmatpush.msra.mxu0 %v313
        %321 = vmatpush.msra.mxu0 %v312
        %322 = vmatpush.msra.mxu0 %v311
        %323 = vmatpush.msra.mxu0 %v310
        %324 = vmatpush.msra.mxu0 %v309
        %325 = vmatpush.msra.mxu0 %v308
        %326 = vmatpush.msra.mxu0 %v307
        %327 = vmatpush.msra.mxu0 %v306
        %328 = vmatpush.msra.mxu0 %v305
        %329 = vmatpush.msra.mxu0 %v304
        %330 = vmatpush.msra.mxu0 %v303
        %331 = vmatpush.msra.mxu0 %v302
        %332 = vmatpush.msra.mxu0 %v301
        %333 = vmatpush.msra.mxu0 %v300
        %334 = vmatpush.msra.mxu0 %v299
        %335 = vmatmul.f32.gmra.mxu0 %v295
        %v336 = vpop.f32.mrf.mxu0
        %v337 = vadd.f32 %v317, %v336
        %338 = vmatmul.f32.gmra.mxu0 %v296
        %v339 = vpop.f32.mrf.mxu0
        %v340 = vadd.f32 %v317, %v339
        %341 = vmatmul.f32.gmra.mxu0 %v297
        %v342 = vpop.f32.mrf.mxu0
        %v343 = vadd.f32 %v317, %v342
        %344 = vmatmul.f32.gmra.mxu0 %v298
        %v345 = vpop.f32.mrf.mxu0
        %v346 = vadd.f32 %v317, %v345
        %347 = vdwg.mxu0
        %v348 = vmax.f32 %v337, 0.0
        %v349 = vmax.f32 %v340, 0.0
        %v350 = vmax.f32 %v343, 0.0
        %v351 = vmax.f32 %v346, 0.0
        %v352 = vld [vmem:[%s3] sm:$0xff]
        %v353 = vld [vmem:[%s3 + $0x8] sm:$0xff]
        %v354 = vld [vmem:[%s3 + $0x10] sm:$0xff]
        %v355 = vld [vmem:[%s3 + $0x18] sm:$0xff]
        %v356 = vld [vmem:[%s3 + $0x20] sm:$0xff]
        %v357 = vld [vmem:[%s3 + $0x28] sm:$0xff]
        %v358 = vld [vmem:[%s3 + $0x30] sm:$0xff]
        %v359 = vld [vmem:[%s3 + $0x38] sm:$0xff]
        %v360 = vld [vmem:[%s4] sm:$0x1]
        %v362 = vperm.slane %v360, 0
        %vm364 = vcmask 523264
        %v366 = vsel %vm364, %v348, 0
        %v369 = vsel %vm364, %v349, 0
        %v372 = vsel %vm364, %v350, 0
        %v375 = vsel %vm364, %v351, 0
        %377 = vmatpush.msra.mxu0 0.0
        %378 = vmatpush.msra.mxu0 0.0
        %379 = vmatpush.msra.mxu0 0.0
        %380 = vmatpush.msra.mxu0 0.0
        %381 = vmatpush.msra.mxu0 0.0
        %382 = vmatpush.msra.mxu0 0.0
        %383 = vmatpush.msra.mxu0 0.0
        %384 = vmatpush.msra.mxu0 0.0
        %385 = vmatpush.msra.mxu0 %v359
        %386 = vmatpush.msra.mxu0 %v358
        %387 = vmatpush.msra.mxu0 %v357
        %388 = vmatpush.msra.mxu0 %v356
        %389 = vmatpush.msra.mxu0 %v355
        %390 = vmatpush.msra.mxu0 %v354
        %391 = vmatpush.msra.mxu0 %v353
        %392 = vmatpush.msra.mxu0 %v352
        %393 = vmatmul.f32.gmra.mxu0 %v366
        %v394 = vpop.f32.mrf.mxu0
        %v395 = vadd.f32 %v362, %v394
        %396 = vmatmul.f32.gmra.mxu0 %v369
        %v397 = vpop.f32.mrf.mxu0
        %v398 = vadd.f32 %v362, %v397
        %399 = vmatmul.f32.gmra.mxu0 %v372
        %v400 = vpop.f32.mrf.mxu0
        %v401 = vadd.f32 %v362, %v400
        %402 = vmatmul.f32.gmra.mxu0 %v375
        %v403 = vpop.f32.mrf.mxu0
        %v404 = vadd.f32 %v362, %v403
        %405 = vdwg.mxu0
        %v406 = vmax.f32 %v395, 0.0
        %v407 = vmax.f32 %v398, 0.0
        %v408 = vmax.f32 %v401, 0.0
        %v409 = vmax.f32 %v404, 0.0
        %v410 = vld [vmem:[%s5] sm:$0xff]
        %v411 = vld [vmem:[%s5 + $0x8] sm:$0xff]
        %v412 = vld [vmem:[%s5 + $0x10] sm:$0xff]
        %v413 = vld [vmem:[%s5 + $0x18] sm:$0xff]
        %v414 = vld [vmem:[%s5 + $0x20] sm:$0xff]
        %v415 = vld [vmem:[%s5 + $0x28] sm:$0xff]
        %v416 = vld [vmem:[%s5 + $0x30] sm:$0xff]
        %v417 = vld [vmem:[%s5 + $0x38] sm:$0xff]
        %v418 = vld [vmem:[%s6] sm:$0x1]
        %v420 = vperm.slane %v418, 0
        %v423 = vsel %vm364, %v406, 0
        %v426 = vsel %vm364, %v407, 0
        %v429 = vsel %vm364, %v408, 0
        %v432 = vsel %vm364, %v409, 0
        %434 = vmatpush.msra.mxu0 0.0
        %435 = vmatpush.msra.mxu0 0.0
        %436 = vmatpush.msra.mxu0 0.0
        %437 = vmatpush.msra.mxu0 0.0
        %438 = vmatpush.msra.mxu0 0.0
        %439 = vmatpush.msra.mxu0 0.0
        %440 = vmatpush.msra.mxu0 0.0
        %441 = vmatpush.msra.mxu0 0.0
        %442 = vmatpush.msra.mxu0 %v417
        %443 = vmatpush.msra.mxu0 %v416
        %444 = vmatpush.msra.mxu0 %v415
        %445 = vmatpush.msra.mxu0 %v414
        %446 = vmatpush.msra.mxu0 %v413
        %447 = vmatpush.msra.mxu0 %v412
        %448 = vmatpush.msra.mxu0 %v411
        %449 = vmatpush.msra.mxu0 %v410
        %450 = vmatmul.f32.gmra.mxu0 %v423
        %v451 = vpop.f32.mrf.mxu0
        %v452 = vadd.f32 %v420, %v451
        %453 = vmatmul.f32.gmra.mxu0 %v426
        %v454 = vpop.f32.mrf.mxu0
        %v455 = vadd.f32 %v420, %v454
        %456 = vmatmul.f32.gmra.mxu0 %v429
        %v457 = vpop.f32.mrf.mxu0
        %v458 = vadd.f32 %v420, %v457
        %459 = vmatmul.f32.gmra.mxu0 %v432
        %v460 = vpop.f32.mrf.mxu0
        %v461 = vadd.f32 %v420, %v460
        %462 = vdwg.mxu0
        %v463 = vadd.f32 %v295, %v452
        %v464 = vadd.f32 %v296, %v455
        %v465 = vadd.f32 %v297, %v458
        %v466 = vadd.f32 %v298, %v461
        %467 = vst [vmem:[%s287] sm:$0xff] %v463
        %468 = vst [vmem:[%s287 + $0x8] sm:$0xff] %v464
        %469 = vst [vmem:[%s287 + $0x10] sm:$0xff] %v465
        %470 = vst [vmem:[%s287 + $0x18] sm:$0xff] %v466
        %s471 = sand.u32 %s182, 1
        %s472 = scalar_lea.sflag [#allocation4], %s471
        %s473 = sand.u32 %s182, 1
        %s474 = smul.addr %s473, 32
        %s475 = scalar_lea.vmem [#allocation5], %s474
        // Predicated region
        $region53: #{tpu_custom_call.1} parent=47 // pred_check
          %p476 = pneg %p192
        $region54: #{tpu_custom_call.1} parent=47 // pred_check_branch
          %478 = sbr.rel (%p476) target = $region56
        $region55: #{tpu_custom_call.1} parent=47 // pred_region
          %s479 = smul.u32 4, %s22
          %481 = vsyncadd %s472, 0
          %s482 = smul.addr %s479, 8
          %s483 = scalar_lea.hbm %s7, %s482
          %s484 = sshll.u32 %s475, 4
          %s485 = int_to_ptr.vmem [resolvable:$true] %s484
          %s486 = sshll.u32 %s483, 4
          %s487 = int_to_ptr.hbm [resolvable:$true] %s486
          %492 = dma.vmem_to_hbm [thread:$0]  %s485, 512, %s487, %s472, 128, 128, 8
        $region56: #{tpu_custom_call.1} parent=47 // pred_fallthru
          _
      $region48: #{tpu_custom_call.1} parent=5 // pred_fallthru
        _
      %p493 = scmp.le.s32.totalorder 2, %s17
      // Predicated region
      $region57: #{tpu_custom_call.1} parent=5 // pred_check
        %p494 = pneg %p493
      $region58: #{tpu_custom_call.1} parent=5 // pred_check_branch
        %496 = sbr.rel (%p494) target = $region60
      $region59: #{tpu_custom_call.1} parent=5 // pred_region
        %s497 = ssub.s32 %s17, 2
        // Predicated region
        $region61: #{tpu_custom_call.1} parent=59 // pred_check
          %p498 = pneg %p198
        $region62: #{tpu_custom_call.1} parent=59 // pred_check_branch
          %500 = sbr.rel (%p498) target = $region64
        $region63: #{tpu_custom_call.1} parent=59 // pred_region
          %s501 = sand.u32 %s183, 1
          %s502 = scalar_lea.sflag [#allocation4], %s501
          %s503 = sand.u32 %s183, 1
          %s504 = smul.addr %s503, 32
          %s505 = scalar_lea.vmem [#allocation5], %s504
          %507 = dma.done %s502, 512
        $region64: #{tpu_custom_call.1} parent=59 // pred_fallthru
          _
      $region60: #{tpu_custom_call.1} parent=5 // pred_fallthru
        _
    $region6: #{tpu_custom_call.1} parent=1 // loop_footer
      %s21 = sadd.s32 1, %s17
    $region7: #{tpu_custom_call.1} parent=1 // loop_footer_branch
      %16 = sbr.rel target = $region3
    $region8: #{tpu_custom_call.1} parent=1 // loop_exit
      _
    %508 = vsyncpa [#allocation3], 1
    %s509 = scalar_lea.sflag [#allocation3], 1
    %510 = vsyncpa %s509, 1
    %511 = vsyncpa [#allocation4], 1
    %s512 = scalar_lea.sflag [#allocation4], 1
    %513 = vsyncpa %s512, 1

// kernel: tpu_custom_call.1
$region0: #{tpu_custom_call.1}
  #allocation0 [shape = 'u32[]', space=smem, size = 0x4, offset = 0x4, fixed_abs, tag = 'smem constant byte address 0x4 - core index']
  #allocation1 [shape = 'u32[72,128]{1,0:T(1,128)}', space=vmem, size = 0x9000, scoped, tag = 'internal scratch']
  %s0 = inlined_call_operand.vmem [shape: f32[64,128], index: 0, kind: input, shape index: {}]
  %s1 = inlined_call_operand.vmem [shape: f32[128,64], index: 1, kind: input, shape index: {}]
  %s2 = inlined_call_operand.hbm [shape: f32[1,64], index: 2, kind: input, shape index: {}]
  %s3 = inlined_call_operand.vmem [shape: f32[64,64], index: 3, kind: input, shape index: {}]
  %s4 = inlined_call_operand.vmem [shape: f32[1,64], index: 4, kind: input, shape index: {}]
  %s5 = inlined_call_operand.vmem [shape: f32[64,128], index: 5, kind: input, shape index: {}]
  %s6 = inlined_call_operand.vmem [shape: f32[1,128], index: 6, kind: input, shape index: {}]
  %s7 = inlined_call_operand.hbm [shape: f32[64,128], index: 7, kind: output, shape index: {}]
  %s8 = sld [smem:[#allocation0]]
  $region65: #{tpu_custom_call.1} parent=0
    _
  %s10 = ssub.s32 1, %s8
  %s11 = scalar_select 0, %s10, %s8
  $region1: #{tpu_custom_call.1} parent=0
    #allocation2 [shape = 'u8[512]{0}', space=vmem, size = 0x400, scoped, tag = 'input window, operand 2, single buffered']
    #allocation3 [shape = 's32[2]{0}', space=sflag, size = 0x8, scoped, tag = 'scoped memory for tpu_custom_call.1']
    #allocation4 [shape = 's32[2]{0}', space=sflag, size = 0x8, scoped, tag = 'scoped memory for tpu_custom_call.1']
    #allocation5 [shape = 'u8[32768]{0}', space=vmem, size = 0x8000, scoped, tag = 'output window, operand 0']
    %12 = vsyncpa [#allocation3], 0
    %13 = vsyncpa [#allocation4], 0
    %s14 = scalar_lea.sflag [#allocation4], 1
    %15 = vsyncpa %s14, 0
    loop: start=0, step=1, limit=4
    $region2: #{tpu_custom_call.1} parent=1 // loop_pre_header
      _
    $region3: #{tpu_custom_call.1} parent=1 // loop_header
      %s17 = sphi 0, %s21
      %p18 = scmp.ge.s32.totalorder %s17, 4
      %s27 = sphi 0, %s29
      %s30 = sphi 0, %s27
      %s31 = sphi 0, %s30
      %s47 = sphi 0, %s31
      %s51 = sphi 0, %s51
      %s53 = sphi 0, %s51
      %s54 = sphi 0, %s53
      %s68 = sphi 0, %s54
      %s72 = sphi 0, %s72
      %s74 = sphi 0, %s72
      %s75 = sphi 0, %s74
      %s89 = sphi 0, %s75
      %s93 = sphi 0, %s93
      %s95 = sphi 0, %s93
      %s96 = sphi 0, %s95
      %s110 = sphi 0, %s96
      %s114 = sphi 0, %s114
      %s116 = sphi 0, %s114
      %s117 = sphi 0, %s116
      %s131 = sphi 0, %s117
      %s135 = sphi 0, %s135
      %s137 = sphi 0, %s135
      %s138 = sphi 0, %s137
      %s152 = sphi 0, %s138
      %s156 = sphi 0, %s156
      %s158 = sphi 0, %s156
      %s159 = sphi 0, %s158
      %s173 = sphi 0, %s159
      %s179 = sphi 0, %s181
      %s182 = sphi 0, %s179
      %s183 = sphi 0, %s182
      %s199 = sphi 0, %s183
    $region4: #{tpu_custom_call.1} parent=1 // loop_header_branch
      %20 = sbr.rel (%p18) target = $region8
    $region5: #{tpu_custom_call.1} parent=1 // loop_body
      %s22 = ssub.s32 %s17, 1
      %s23 = ssub.s32 %s17, 2
      %s24 = sadd.s32 %s17, 1
      %s25 = ssub.s32 %s17, %s24
      %p26 = scmp.eq.s32.totalorder %s25, 0
      %s28 = sadd.s32 %s27, 1
      %s29 = scalar_select %p26, %s27, %s28
      %p32 = pneg %p26
      %p33 = scmp.eq.s32.totalorder %s17, 1
      %p34 = por %p32, %p33
      %p35 = scmp.ne.s32.totalorder %s27, %s30
      %p36 = scmp.eq.s32.totalorder %s17, 0
      %p37 = por %p35, %p36
      %p38 = scmp.ne.s32.totalorder %s27, %s30
      %p39 = scmp.eq.s32.totalorder %s22, 1
      %p40 = por %p38, %p39
      %p41 = scmp.ne.s32.totalorder %s30, %s31
      %p42 = scmp.eq.s32.totalorder %s22, 0
      %p43 = por %p41, %p42
      %p44 = scmp.ne.s32.totalorder %s30, %s31
      %p45 = scmp.eq.s32.totalorder %s23, 1
      %p46 = por %p44, %p45
      %p48 = scmp.ne.s32.totalorder %s31, %s47
      %p49 = scmp.eq.s32.totalorder %s23, 0
      %p50 = por %p48, %p49
      %s52 = sadd.s32 %s51, 1
      %p55 = scmp.eq.s32.totalorder %s17, 1
      %p56 = scmp.ne.s32.totalorder %s51, %s53
      %p57 = scmp.eq.s32.totalorder %s17, 0
      %p58 = por %p56, %p57
      %p59 = scmp.ne.s32.totalorder %s51, %s53
      %p60 = scmp.eq.s32.totalorder %s22, 1
      %p61 = por %p59, %p60
      %p62 = scmp.ne.s32.totalorder %s53, %s54
      %p63 = scmp.eq.s32.totalorder %s22, 0
      %p64 = por %p62, %p63
      %p65 = scmp.ne.s32.totalorder %s53, %s54
      %p66 = scmp.eq.s32.totalorder %s23, 1
      %p67 = por %p65, %p66
      %p69 = scmp.ne.s32.totalorder %s54, %s68
      %p70 = scmp.eq.s32.totalorder %s23, 0
      %p71 = por %p69, %p70
      %s73 = sadd.s32 %s72, 1
      %p76 = scmp.eq.s32.totalorder %s17, 1
      %p77 = scmp.ne.s32.totalorder %s72, %s74
      %p78 = scmp.eq.s32.totalorder %s17, 0
      %p79 = por %p77, %p78
      %p80 = scmp.ne.s32.totalorder %s72, %s74
      %p81 = scmp.eq.s32.totalorder %s22, 1
      %p82 = por %p80, %p81
      %p83 = scmp.ne.s32.totalorder %s74, %s75
      %p84 = scmp.eq.s32.totalorder %s22, 0
      %p85 = por %p83, %p84
      %p86 = scmp.ne.s32.totalorder %s74, %s75
      %p87 = scmp.eq.s32.totalorder %s23, 1
      %p88 = por %p86, %p87
      %p90 = scmp.ne.s32.totalorder %s75, %s89
      %p91 = scmp.eq.s32.totalorder %s23, 0
      %p92 = por %p90, %p91
      %s94 = sadd.s32 %s93, 1
      %p97 = scmp.eq.s32.totalorder %s17, 1
      %p98 = scmp.ne.s32.totalorder %s93, %s95
      %p99 = scmp.eq.s32.totalorder %s17, 0
      %p100 = por %p98, %p99
      %p101 = scmp.ne.s32.totalorder %s93, %s95
      %p102 = scmp.eq.s32.totalorder %s22, 1
      %p103 = por %p101, %p102
      %p104 = scmp.ne.s32.totalorder %s95, %s96
      %p105 = scmp.eq.s32.totalorder %s22, 0
      %p106 = por %p104, %p105
      %p107 = scmp.ne.s32.totalorder %s95, %s96
      %p108 = scmp.eq.s32.totalorder %s23, 1
      %p109 = por %p107, %p108
      %p111 = scmp.ne.s32.totalorder %s96, %s110
      %p112 = scmp.eq.s32.totalorder %s23, 0
      %p113 = por %p111, %p112
      %s115 = sadd.s32 %s114, 1
      %p118 = scmp.eq.s32.totalorder %s17, 1
      %p119 = scmp.ne.s32.totalorder %s114, %s116
      %p120 = scmp.eq.s32.totalorder %s17, 0
      %p121 = por %p119, %p120
      %p122 = scmp.ne.s32.totalorder %s114, %s116
      %p123 = scmp.eq.s32.totalorder %s22, 1
      %p124 = por %p122, %p123
      %p125 = scmp.ne.s32.totalorder %s116, %s117
      %p126 = scmp.eq.s32.totalorder %s22, 0
      %p127 = por %p125, %p126
      %p128 = scmp.ne.s32.totalorder %s116, %s117
      %p129 = scmp.eq.s32.totalorder %s23, 1
      %p130 = por %p128, %p129
      %p132 = scmp.ne.s32.totalorder %s117, %s131
      %p133 = scmp.eq.s32.totalorder %s23, 0
      %p134 = por %p132, %p133
      %s136 = sadd.s32 %s135, 1
      %p139 = scmp.eq.s32.totalorder %s17, 1
      %p140 = scmp.ne.s32.totalorder %s135, %s137
      %p141 = scmp.eq.s32.totalorder %s17, 0
      %p142 = por %p140, %p141
      %p143 = scmp.ne.s32.totalorder %s135, %s137
      %p144 = scmp.eq.s32.totalorder %s22, 1
      %p145 = por %p143, %p144
      %p146 = scmp.ne.s32.totalorder %s137, %s138
      %p147 = scmp.eq.s32.totalorder %s22, 0
      %p148 = por %p146, %p147
      %p149 = scmp.ne.s32.totalorder %s137, %s138
      %p150 = scmp.eq.s32.totalorder %s23, 1
      %p151 = por %p149, %p150
      %p153 = scmp.ne.s32.totalorder %s138, %s152
      %p154 = scmp.eq.s32.totalorder %s23, 0
      %p155 = por %p153, %p154
      %s157 = sadd.s32 %s156, 1
      %p160 = scmp.eq.s32.totalorder %s17, 1
      %p161 = scmp.ne.s32.totalorder %s156, %s158
      %p162 = scmp.eq.s32.totalorder %s17, 0
      %p163 = por %p161, %p162
      %p164 = scmp.ne.s32.totalorder %s156, %s158
      %p165 = scmp.eq.s32.totalorder %s22, 1
      %p166 = por %p164, %p165
      %p167 = scmp.ne.s32.totalorder %s158, %s159
      %p168 = scmp.eq.s32.totalorder %s22, 0
      %p169 = por %p167, %p168
      %p170 = scmp.ne.s32.totalorder %s158, %s159
      %p171 = scmp.eq.s32.totalorder %s23, 1
      %p172 = por %p170, %p171
      %p174 = scmp.ne.s32.totalorder %s159, %s173
      %p175 = scmp.eq.s32.totalorder %s23, 0
      %p176 = por %p174, %p175
      %s177 = ssub.s32 %s17, %s24
      %p178 = scmp.eq.s32.totalorder %s177, 0
      %s180 = sadd.s32 %s179, 1
      %s181 = scalar_select %p178, %s179, %s180
      %p184 = pneg %p178
      %p185 = scmp.eq.s32.totalorder %s17, 1
      %p186 = por %p184, %p185
      %p187 = scmp.ne.s32.totalorder %s179, %s182
      %p188 = scmp.eq.s32.totalorder %s17, 0
      %p189 = por %p187, %p188
      %p190 = scmp.ne.s32.totalorder %s179, %s182
      %p191 = scmp.eq.s32.totalorder %s22, 1
      %p192 = por %p190, %p191
      %p193 = scmp.ne.s32.totalorder %s182, %s183
      %p194 = scmp.eq.s32.totalorder %s22, 0
      %p195 = por %p193, %p194
      %p196 = scmp.ne.s32.totalorder %s182, %s183
      %p197 = scmp.eq.s32.totalorder %s23, 1
      %p198 = por %p196, %p197
      %p200 = scmp.ne.s32.totalorder %s183, %s199
      %p201 = scmp.eq.s32.totalorder %s23, 0
      %p202 = por %p200, %p201
      %p203 = scmp.le.s32.totalorder 1, %s17
      %p204 = scmp.lt.s32.totalorder %s17, 3
      %p205 = pnand %p203, %p204
      %p206 = pneg %p205
      // Predicated region
      $region9: #{tpu_custom_call.1} parent=5 // pred_check
        _
      $region10: #{tpu_custom_call.1} parent=5 // pred_check_branch
        %208 = sbr.rel (%p205) target = $region12
      $region11: #{tpu_custom_call.1} parent=5 // pred_region
        %s209 = ssub.s32 %s17, 1
        // Predicated region
        $region13: #{tpu_custom_call.1} parent=11 // pred_check
          %p210 = pneg %p64
        $region14: #{tpu_custom_call.1} parent=11 // pred_check_branch
          %212 = sbr.rel (%p210) target = $region16
        $region15: #{tpu_custom_call.1} parent=11 // pred_region
          _
        $region16: #{tpu_custom_call.1} parent=11 // pred_fallthru
          _
        // Predicated region
        $region17: #{tpu_custom_call.1} parent=11 // pred_check
          %p213 = pneg %p85
        $region18: #{tpu_custom_call.1} parent=11 // pred_check_branch
          %215 = sbr.rel (%p213) target = $region20
        $region19: #{tpu_custom_call.1} parent=11 // pred_region
          %217 = vsyncadd [#allocation3], 0
          %s219 = sshll.u32 %s2, 4
          %s220 = int_to_ptr.hbm [resolvable:$true] %s219
          %s221 = sshll.u32 [#allocation2], 4
          %s222 = int_to_ptr.vmem [resolvable:$true] %s221
          %224 = dma.hbm_to_vmem [thread:$0]  %s220, 16, %s222, [#allocation3]
        $region20: #{tpu_custom_call.1} parent=11 // pred_fallthru
          _
        // Predicated region
        $region21: #{tpu_custom_call.1} parent=11 // pred_check
          %p225 = pneg %p106
        $region22: #{tpu_custom_call.1} parent=11 // pred_check_branch
          %227 = sbr.rel (%p225) target = $region24
        $region23: #{tpu_custom_call.1} parent=11 // pred_region
          _
        $region24: #{tpu_custom_call.1} parent=11 // pred_fallthru
          _
        // Predicated region
        $region25: #{tpu_custom_call.1} parent=11 // pred_check
          %p228 = pneg %p127
        $region26: #{tpu_custom_call.1} parent=11 // pred_check_branch
          %230 = sbr.rel (%p228) target = $region28
        $region27: #{tpu_custom_call.1} parent=11 // pred_region
          _
        $region28: #{tpu_custom_call.1} parent=11 // pred_fallthru
          _
        // Predicated region
        $region29: #{tpu_custom_call.1} parent=11 // pred_check
          %p231 = pneg %p148
        $region30: #{tpu_custom_call.1} parent=11 // pred_check_branch
          %233 = sbr.rel (%p231) target = $region32
        $region31: #{tpu_custom_call.1} parent=11 // pred_region
          _
        $region32: #{tpu_custom_call.1} parent=11 // pred_fallthru
          _
        // Predicated region
        $region33: #{tpu_custom_call.1} parent=11 // pred_check
          %p234 = pneg %p169
        $region34: #{tpu_custom_call.1} parent=11 // pred_check_branch
          %236 = sbr.rel (%p234) target = $region36
        $region35: #{tpu_custom_call.1} parent=11 // pred_region
          _
        $region36: #{tpu_custom_call.1} parent=11 // pred_fallthru
          _
      $region12: #{tpu_custom_call.1} parent=5 // pred_fallthru
        _
      %p237 = scmp.lt.s32.totalorder %s17, 2
      // Predicated region
      $region37: #{tpu_custom_call.1} parent=5 // pred_check
        %p238 = pneg %p237
      $region38: #{tpu_custom_call.1} parent=5 // pred_check_branch
        %240 = sbr.rel (%p238) target = $region40
      $region39: #{tpu_custom_call.1} parent=5 // pred_region
        // Predicated region
        $region41: #{tpu_custom_call.1} parent=39 // pred_check
          %p241 = pneg %p37
        $region42: #{tpu_custom_call.1} parent=39 // pred_check_branch
          %243 = sbr.rel (%p241) target = $region44
        $region43: #{tpu_custom_call.1} parent=39 // pred_region
          %s244 = smul.u32 4, %s17
          %p245 = scmp.lt.s32.totalorder %s244, 7
          %s246 = scalar_select %p245, %s244, 7
          %s247 = smul.addr %s246, 8
          %s248 = scalar_lea.vmem %s0, %s247
          %s249 = smul.u32 4, %s17
        $region44: #{tpu_custom_call.1} parent=39 // pred_fallthru
          _
      $region40: #{tpu_custom_call.1} parent=5 // pred_fallthru
        _
      %p250 = scmp.le.s32.totalorder 1, %s17
      %p251 = scmp.lt.s32.totalorder %s17, 3
      %p252 = pnand %p250, %p251
      %p253 = pneg %p252
      // Predicated region
      $region45: #{tpu_custom_call.1} parent=5 // pred_check
        _
      $region46: #{tpu_custom_call.1} parent=5 // pred_check_branch
        %255 = sbr.rel (%p252) target = $region48
      $region47: #{tpu_custom_call.1} parent=5 // pred_region
        %s256 = ssub.s32 %s17, 1
        // Predicated region
        $region49: #{tpu_custom_call.1} parent=47 // pred_check
          %p257 = pneg %p85
        $region50: #{tpu_custom_call.1} parent=47 // pred_check_branch
          %259 = sbr.rel (%p257) target = $region52
        $region51: #{tpu_custom_call.1} parent=47 // pred_region
          %261 = dma.done [#allocation3], 16
        $region52: #{tpu_custom_call.1} parent=47 // pred_fallthru
          _
        %s262 = smul.u32 4, %s22
        %p263 = scmp.lt.s32.totalorder %s262, 7
        %s264 = scalar_select %p263, %s262, 7
        %s265 = smul.addr %s264, 8
        %s266 = scalar_lea.vmem %s0, %s265
        %p267 = pneg %p43
        %p268 = pneg %p40
        %p269 = pneg %p64
        %p270 = pneg %p61
        %p271 = pneg %p85
        %p272 = pneg %p82
        %p273 = pneg %p106
        %p274 = pneg %p103
        %p275 = pneg %p127
        %p276 = pneg %p124
        %p277 = pneg %p148
        %p278 = pneg %p145
        %p279 = pneg %p169
        %p280 = pneg %p166
        %p281 = pneg %p195
        %p282 = pneg %p192
        %s283 = sand.u32 %s182, 1
        %s284 = scalar_lea.sflag [#allocation4], %s283
        %s285 = sand.u32 %s182, 1
        %s286 = smul.addr %s285, 32
        %s287 = scalar_lea.vmem [#allocation5], %s286
        %s288 = smul.u32 4, %s22
        %p289 = scmp.lt.s32.totalorder %s288, 7
        %s290 = scalar_select %p289, %s288, 7
        %s291 = smul.addr %s290, 8
        %s292 = scalar_lea.vmem %s0, %s291
        %s293 = smul.u32 4, %s22
        %s294 = smul.u32 4, %s22
        %v295 = vld [vmem:[%s292] sm:$0xff]
        %v296 = vld [vmem:[%s292 + $0x8] sm:$0xff]
        %v297 = vld [vmem:[%s292 + $0x10] sm:$0xff]
        %v298 = vld [vmem:[%s292 + $0x18] sm:$0xff]
        %v299 = vld [vmem:[%s1] sm:$0xff]
        %v300 = vld [vmem:[%s1 + $0x8] sm:$0xff]
        %v301 = vld [vmem:[%s1 + $0x10] sm:$0xff]
        %v302 = vld [vmem:[%s1 + $0x18] sm:$0xff]
        %v303 = vld [vmem:[%s1 + $0x20] sm:$0xff]
        %v304 = vld [vmem:[%s1 + $0x28] sm:$0xff]
        %v305 = vld [vmem:[%s1 + $0x30] sm:$0xff]
        %v306 = vld [vmem:[%s1 + $0x38] sm:$0xff]
        %v307 = vld [vmem:[%s1 + $0x40] sm:$0xff]
        %v308 = vld [vmem:[%s1 + $0x48] sm:$0xff]
        %v309 = vld [vmem:[%s1 + $0x50] sm:$0xff]
        %v310 = vld [vmem:[%s1 + $0x58] sm:$0xff]
        %v311 = vld [vmem:[%s1 + $0x60] sm:$0xff]
        %v312 = vld [vmem:[%s1 + $0x68] sm:$0xff]
        %v313 = vld [vmem:[%s1 + $0x70] sm:$0xff]
        %v314 = vld [vmem:[%s1 + $0x78] sm:$0xff]
        %v315 = vld [vmem:[#allocation2] sm:$0x1]
        %v317 = vperm.slane %v315, 0
        %319 = vmatpush.msra.mxu0 %v314
        %320 = vmatpush.msra.mxu0 %v313
        %321 = vmatpush.msra.mxu0 %v312
        %322 = vmatpush.msra.mxu0 %v311
        %323 = vmatpush.msra.mxu0 %v310
        %324 = vmatpush.msra.mxu0 %v309
        %325 = vmatpush.msra.mxu0 %v308
        %326 = vmatpush.msra.mxu0 %v307
        %327 = vmatpush.msra.mxu0 %v306
        %328 = vmatpush.msra.mxu0 %v305
        %329 = vmatpush.msra.mxu0 %v304
        %330 = vmatpush.msra.mxu0 %v303
        %331 = vmatpush.msra.mxu0 %v302
        %332 = vmatpush.msra.mxu0 %v301
        %333 = vmatpush.msra.mxu0 %v300
        %334 = vmatpush.msra.mxu0 %v299
        %335 = vmatmul.f32.gmra.mxu0 %v295
        %v336 = vpop.f32.mrf.mxu0
        %v337 = vadd.f32 %v317, %v336
        %338 = vmatmul.f32.gmra.mxu0 %v296
        %v339 = vpop.f32.mrf.mxu0
        %v340 = vadd.f32 %v317, %v339
        %341 = vmatmul.f32.gmra.mxu0 %v297
        %v342 = vpop.f32.mrf.mxu0
        %v343 = vadd.f32 %v317, %v342
        %344 = vmatmul.f32.gmra.mxu0 %v298
        %v345 = vpop.f32.mrf.mxu0
        %v346 = vadd.f32 %v317, %v345
        %347 = vdwg.mxu0
        %v348 = vmax.f32 %v337, 0.0
        %v349 = vmax.f32 %v340, 0.0
        %v350 = vmax.f32 %v343, 0.0
        %v351 = vmax.f32 %v346, 0.0
        %v352 = vld [vmem:[%s3] sm:$0xff]
        %v353 = vld [vmem:[%s3 + $0x8] sm:$0xff]
        %v354 = vld [vmem:[%s3 + $0x10] sm:$0xff]
        %v355 = vld [vmem:[%s3 + $0x18] sm:$0xff]
        %v356 = vld [vmem:[%s3 + $0x20] sm:$0xff]
        %v357 = vld [vmem:[%s3 + $0x28] sm:$0xff]
        %v358 = vld [vmem:[%s3 + $0x30] sm:$0xff]
        %v359 = vld [vmem:[%s3 + $0x38] sm:$0xff]
        %v360 = vld [vmem:[%s4] sm:$0x1]
        %v362 = vperm.slane %v360, 0
        %vm364 = vcmask 523264
        %v366 = vsel %vm364, %v348, 0
        %v369 = vsel %vm364, %v349, 0
        %v372 = vsel %vm364, %v350, 0
        %v375 = vsel %vm364, %v351, 0
        %377 = vmatpush.msra.mxu0 0.0
        %378 = vmatpush.msra.mxu0 0.0
        %379 = vmatpush.msra.mxu0 0.0
        %380 = vmatpush.msra.mxu0 0.0
        %381 = vmatpush.msra.mxu0 0.0
        %382 = vmatpush.msra.mxu0 0.0
        %383 = vmatpush.msra.mxu0 0.0
        %384 = vmatpush.msra.mxu0 0.0
        %385 = vmatpush.msra.mxu0 %v359
        %386 = vmatpush.msra.mxu0 %v358
        %387 = vmatpush.msra.mxu0 %v357
        %388 = vmatpush.msra.mxu0 %v356
        %389 = vmatpush.msra.mxu0 %v355
        %390 = vmatpush.msra.mxu0 %v354
        %391 = vmatpush.msra.mxu0 %v353
        %392 = vmatpush.msra.mxu0 %v352
        %393 = vmatmul.f32.gmra.mxu0 %v366
        %v394 = vpop.f32.mrf.mxu0
        %v395 = vadd.f32 %v362, %v394
        %396 = vmatmul.f32.gmra.mxu0 %v369
        %v397 = vpop.f32.mrf.mxu0
        %v398 = vadd.f32 %v362, %v397
        %399 = vmatmul.f32.gmra.mxu0 %v372
        %v400 = vpop.f32.mrf.mxu0
        %v401 = vadd.f32 %v362, %v400
        %402 = vmatmul.f32.gmra.mxu0 %v375
        %v403 = vpop.f32.mrf.mxu0
        %v404 = vadd.f32 %v362, %v403
        %405 = vdwg.mxu0
        %v406 = vmax.f32 %v395, 0.0
        %v407 = vmax.f32 %v398, 0.0
        %v408 = vmax.f32 %v401, 0.0
        %v409 = vmax.f32 %v404, 0.0
        %v410 = vld [vmem:[%s5] sm:$0xff]
        %v411 = vld [vmem:[%s5 + $0x8] sm:$0xff]
        %v412 = vld [vmem:[%s5 + $0x10] sm:$0xff]
        %v413 = vld [vmem:[%s5 + $0x18] sm:$0xff]
        %v414 = vld [vmem:[%s5 + $0x20] sm:$0xff]
        %v415 = vld [vmem:[%s5 + $0x28] sm:$0xff]
        %v416 = vld [vmem:[%s5 + $0x30] sm:$0xff]
        %v417 = vld [vmem:[%s5 + $0x38] sm:$0xff]
        %v418 = vld [vmem:[%s6] sm:$0x1]
        %v420 = vperm.slane %v418, 0
        %v423 = vsel %vm364, %v406, 0
        %v426 = vsel %vm364, %v407, 0
        %v429 = vsel %vm364, %v408, 0
        %v432 = vsel %vm364, %v409, 0
        %434 = vmatpush.msra.mxu0 0.0
        %435 = vmatpush.msra.mxu0 0.0
        %436 = vmatpush.msra.mxu0 0.0
        %437 = vmatpush.msra.mxu0 0.0
        %438 = vmatpush.msra.mxu0 0.0
        %439 = vmatpush.msra.mxu0 0.0
        %440 = vmatpush.msra.mxu0 0.0
        %441 = vmatpush.msra.mxu0 0.0
        %442 = vmatpush.msra.mxu0 %v417
        %443 = vmatpush.msra.mxu0 %v416
        %444 = vmatpush.msra.mxu0 %v415
        %445 = vmatpush.msra.mxu0 %v414
        %446 = vmatpush.msra.mxu0 %v413
        %447 = vmatpush.msra.mxu0 %v412
        %448 = vmatpush.msra.mxu0 %v411
        %449 = vmatpush.msra.mxu0 %v410
        %450 = vmatmul.f32.gmra.mxu0 %v423
        %v451 = vpop.f32.mrf.mxu0
        %v452 = vadd.f32 %v420, %v451
        %453 = vmatmul.f32.gmra.mxu0 %v426
        %v454 = vpop.f32.mrf.mxu0
        %v455 = vadd.f32 %v420, %v454
        %456 = vmatmul.f32.gmra.mxu0 %v429
        %v457 = vpop.f32.mrf.mxu0
        %v458 = vadd.f32 %v420, %v457
        %459 = vmatmul.f32.gmra.mxu0 %v432
        %v460 = vpop.f32.mrf.mxu0
        %v461 = vadd.f32 %v420, %v460
        %462 = vdwg.mxu0
        %v463 = vadd.f32 %v295, %v452
        %v464 = vadd.f32 %v296, %v455
        %v465 = vadd.f32 %v297, %v458
        %v466 = vadd.f32 %v298, %v461
        %467 = vst [vmem:[%s287] sm:$0xff] %v463
        %468 = vst [vmem:[%s287 + $0x8] sm:$0xff] %v464
        %469 = vst [vmem:[%s287 + $0x10] sm:$0xff] %v465
        %470 = vst [vmem:[%s287 + $0x18] sm:$0xff] %v466
        %s471 = sand.u32 %s182, 1
        %s472 = scalar_lea.sflag [#allocation4], %s471
        %s473 = sand.u32 %s182, 1
        %s474 = smul.addr %s473, 32
        %s475 = scalar_lea.vmem [#allocation5], %s474
        // Predicated region
        $region53: #{tpu_custom_call.1} parent=47 // pred_check
          %p476 = pneg %p192
        $region54: #{tpu_custom_call.1} parent=47 // pred_check_branch
          %478 = sbr.rel (%p476) target = $region56
        $region55: #{tpu_custom_call.1} parent=47 // pred_region
          %s479 = smul.u32 4, %s22
          %481 = vsyncadd %s472, 0
          %s482 = smul.addr %s479, 8
          %s483 = scalar_lea.hbm %s7, %s482
          %s484 = sshll.u32 %s475, 4
          %s485 = int_to_ptr.vmem [resolvable:$true] %s484
          %s486 = sshll.u32 %s483, 4
          %s487 = int_to_ptr.hbm [resolvable:$true] %s486
          %492 = dma.vmem_to_hbm [thread:$0]  %s485, 512, %s487, %s472, 128, 128, 8
        $region56: #{tpu_custom_call.1} parent=47 // pred_fallthru
          _
      $region48: #{tpu_custom_call.1} parent=5 // pred_fallthru
        _
      %p493 = scmp.le.s32.totalorder 2, %s17
      // Predicated region
      $region57: #{tpu_custom_call.1} parent=5 // pred_check
        %p494 = pneg %p493
      $region58: #{tpu_custom_call.1} parent=5 // pred_check_branch
        %496 = sbr.rel (%p494) target = $region60
      $region59: #{tpu_custom_call.1} parent=5 // pred_region
        %s497 = ssub.s32 %s17, 2
        // Predicated region
        $region61: #{tpu_custom_call.1} parent=59 // pred_check
          %p498 = pneg %p198
        $region62: #{tpu_custom_call.1} parent=59 // pred_check_branch
          %500 = sbr.rel (%p498) target = $region64
        $region63: #{tpu_custom_call.1} parent=59 // pred_region
          %s501 = sand.u32 %s183, 1
          %s502 = scalar_lea.sflag [#allocation4], %s501
          %s503 = sand.u32 %s183, 1
          %s504 = smul.addr %s503, 32
          %s505 = scalar_lea.vmem [#allocation5], %s504
          %507 = dma.done %s502, 512
        $region64: #{tpu_custom_call.1} parent=59 // pred_fallthru
          _
      $region60: #{tpu_custom_call.1} parent=5 // pred_fallthru
        _
    $region6: #{tpu_custom_call.1} parent=1 // loop_footer
      %s21 = sadd.s32 1, %s17
    $region7: #{tpu_custom_call.1} parent=1 // loop_footer_branch
      %16 = sbr.rel target = $region3
    $region8: #{tpu_custom_call.1} parent=1 // loop_exit
      _
    %508 = vsyncpa [#allocation3], 1
    %s509 = scalar_lea.sflag [#allocation3], 1
    %510 = vsyncpa %s509, 1
    %511 = vsyncpa [#allocation4], 1
    %s512 = scalar_lea.sflag [#allocation4], 1
    %513 = vsyncpa %s512, 1

</llo_original>
